<compile_context>
chip_gen: v7x
topology: tpu7x:2x2x1
jax: 0.10.0
libtpu: 0.0.40
codegen_flags: <defaults>
</compile_context>

<pallas_src>
import functools

import jax
import jax.numpy as jnp
from jax.experimental import pallas as pl
from jax.experimental.pallas import tpu as pltpu

NUM_CLASSES = 10
FEAT_DIM = 2
LAMDA = 0.2

_LANE = 128
_MAX_TILE = 1024


def center_loss_kernel(f_ref, lab_ref, center_ref, w_t_ref,
                       out_ref, part_ref, *, true_b, padded):
    """One batch lane-tile.

    f_ref:      (D, TB)  float32   features, transposed (lane-dense batch)
    lab_ref:    (1, TB)  int32     labels
    center_ref: (C, D)   float32   class centers
    w_t_ref:    (C, D)   float32   classifier weight, transposed
    out_ref:    (C, TB)            logits^T (lane-dense store)
    part_ref:   (1,1,128) float32  per-tile partials:
                                   [0,0,0] = sum_b (logsumexp_b - picked_b)
                                   [0,0,1] = sum_b ||f_b - center[label_b]||^2
    """
    f = f_ref[...]
    lab = lab_ref[...]
    center = center_ref[...]
    w_t = w_t_ref[...]

    c = center.shape[0]
    tb = f.shape[1]

    # One-hot selection mask built in-kernel: no (B, C) one-hot DMA, no MXU.
    cls = jax.lax.broadcasted_iota(jnp.int32, (c, tb), 0)           # (C, TB)
    sel = (cls == lab).astype(jnp.float32)                          # (C, TB)
    # TODO(synk): out-of-range labels silently give sel == 0 (picked logit 0,
    # gathered center 0) instead of erroring like torch index_select/gather.

    # logits^T = W^T f : contraction depth D == 2, so a 2-term VPU
    # outer-product is strictly cheaper than an underfilled MXU matmul.
    logits_t = w_t[:, 0:1] * f[0:1, :] + w_t[:, 1:2] * f[1:2, :]    # (C, TB)
    out_ref[...] = logits_t.astype(out_ref.dtype)

    # center.index_select(0, label) == masked sublane reduction (VPU + XLU).
    nc0 = jnp.sum(sel * center[:, 0:1], axis=0, keepdims=True)      # (1, TB)
    nc1 = jnp.sum(sel * center[:, 1:2], axis=0, keepdims=True)      # (1, TB)
    d0 = f[0:1, :] - nc0
    d1 = f[1:2, :] - nc1
    sq = d0 * d0 + d1 * d1                                          # (1, TB)

    # Cross-entropy pieces; class reductions run over the sublane axis.
    m = jnp.max(logits_t, axis=0, keepdims=True)                    # (1, TB)
    lse = m + jnp.log(jnp.sum(jnp.exp(logits_t - m), axis=0, keepdims=True))
    picked = jnp.sum(sel * logits_t, axis=0, keepdims=True)         # (1, TB)
    ce = lse - picked                                               # (1, TB)

    lane = jax.lax.broadcasted_iota(jnp.int32, (1, 1, 128), 2)

    def write_partials(ce_vec, sq_vec):
        ce_s = jnp.sum(ce_vec)
        sq_s = jnp.sum(sq_vec)
        part_ref[...] = jnp.where(lane == 0, ce_s,
                                  jnp.where(lane == 1, sq_s, 0.0))

    # Full tiles write unmasked sums (hot path: no iota/compare/multiplies).
    write_partials(ce, sq)

    if padded:
        # Only the last tile carries padded batch columns; recompute the
        # masked sums (and overwrite the partials) on that tile alone.
        i = pl.program_id(0)

        @pl.when(i == pl.num_programs(0) - 1)
        def _mask_tail():
            col = i * tb + jax.lax.broadcasted_iota(jnp.int32, (1, tb), 1)
            valid = (col < true_b).astype(jnp.float32)
            write_partials(ce * valid, sq * valid)


def center_loss_forward(feature, label, center, weight, *, lamda=LAMDA,
                        logits_layout="cb", logits_dtype=jnp.float32,
                        max_tile=_MAX_TILE):
    """CenterLoss forward.  Returns (logits, scalar loss).

    logits_layout:
      "cb" (default): logits returned as (C, B), the kernel's native
          lane-dense layout — no extra HBM pass for a transpose.
      "bc": logits returned as (B, C), exactly matching the PyTorch module
          (adds one XLA transpose over the logits).
    logits_dtype: jnp.bfloat16 halves the dominant logits HBM write if the
      consumer tolerates it; internal math stays float32.
    """
    b, d = feature.shape
    c = center.shape[0]
    assert max_tile % _LANE == 0

    feat_t = feature.astype(jnp.float32).T           # (D, B) lane-dense batch
    lab2 = label.astype(jnp.int32).reshape(1, b)     # (1, B)
    center_f = center.astype(jnp.float32)            # (C, D)
    w_t = weight.astype(jnp.float32).T               # (C, D)

    if b <= max_tile:
        # Single-tile fast path: no padding / zero-fill copies; blocks equal
        # the full array dims so the (8,128) divisibility rule is waived.
        tb, bp, num_tiles, padded = b, b, 1, False
    else:
        tb = max_tile
        bp = ((b + tb - 1) // tb) * tb
        num_tiles = bp // tb
        padded = bp != b
        if padded:
            feat_t = jnp.zeros((d, bp), jnp.float32).at[:, :b].set(feat_t)
            lab2 = jnp.zeros((1, bp), jnp.int32).at[:, :b].set(lab2)

    kernel = functools.partial(center_loss_kernel, true_b=b, padded=padded)

    logits_t, parts = pl.pallas_call(
        kernel,
        out_shape=(
            jax.ShapeDtypeStruct((c, bp), logits_dtype),
            jax.ShapeDtypeStruct((num_tiles, 1, 128), jnp.float32),
        ),
        grid=(num_tiles,),
        in_specs=[
            pl.BlockSpec((d, tb), lambda i: (0, i)),
            pl.BlockSpec((1, tb), lambda i: (0, i)),
            pl.BlockSpec((c, d), lambda i: (0, 0)),
            pl.BlockSpec((c, d), lambda i: (0, 0)),
        ],
        out_specs=(
            pl.BlockSpec((c, tb), lambda i: (0, i)),
            # Independent per-tile partial sums -> no loop-carried accumulator,
            # so the batch grid axis can be megacore-sharded on v7x.
            pl.BlockSpec((1, 1, 128), lambda i: (i, 0, 0)),
        ),
        compiler_params=pltpu.CompilerParams(
            dimension_semantics=("parallel",)),
    )(feat_t, lab2, center_f, w_t)

    # Tiny final reduction over the per-tile partials stays in the wrapper.
    ce_loss = jnp.sum(parts[:, 0, 0]) / b
    centerloss = jnp.sqrt(jnp.sum(parts[:, 0, 1])) / (2.0 * b)
    loss = ce_loss + lamda * centerloss

    if logits_layout == "cb":
        out = logits_t if bp == b else logits_t[:, :b]
    else:
        out = logits_t[:, :b].T          # PyTorch-compatible (B, C) layout
    return out, loss


if __name__ == "__main__":
    key = jax.random.PRNGKey(0)
    kc, kw, k1f, k1l, k2f, k2l = jax.random.split(key, 6)

    # Parameters as in the PyTorch module.
    # self.center = nn.Parameter(10 * torch.randn(10, 2))
    center = 10.0 * jax.random.normal(kc, (NUM_CLASSES, FEAT_DIM), jnp.float32)
    # nn.init.xavier_uniform_(self.weight) on shape (2, 10)
    bound = jnp.sqrt(6.0 / (FEAT_DIM + NUM_CLASSES))
    weight = jax.random.uniform(kw, (FEAT_DIM, NUM_CLASSES), jnp.float32,
                                minval=-bound, maxval=bound)

    def reference(feature, label):
        bsz = feature.shape[0]
        n_center = center[label]
        distance = jnp.sqrt(jnp.sum((feature - n_center) ** 2))
        centerloss = distance / (2.0 * bsz)
        logits = feature @ weight
        logp = jax.nn.log_softmax(logits, axis=-1)
        ce = -jnp.mean(logp[jnp.arange(bsz), label])
        return logits, ce + LAMDA * centerloss

    def check(bsz, kf, kl, layout, max_tile=_MAX_TILE):
        feature = jax.random.normal(kf, (bsz, FEAT_DIM), jnp.float32)
        label = jax.random.randint(kl, (bsz,), 0, NUM_CLASSES, jnp.int32)
        out, loss = center_loss_forward(feature, label, center, weight,
                                        logits_layout=layout,
                                        max_tile=max_tile)
        jax.block_until_ready((out, loss))
        logits_ref, loss_ref = reference(feature, label)
        want = logits_ref if layout == "bc" else logits_ref.T
        assert out.shape == want.shape, (out.shape, want.shape)
        assert jnp.allclose(out, want, atol=1e-5, rtol=1e-5), "logits mismatch"
        assert jnp.allclose(loss, loss_ref, atol=1e-4, rtol=1e-5), "loss mismatch"

    # Primary small example: single-tile fast path, kernel-native (C, B) out.
    check(8, k1f, k1l, "cb")
    # Same inputs, PyTorch-shaped (B, C) output path.
    check(8, k1f, k1l, "bc")
    # Padded multi-tile path (max_tile shrunk so a small batch spans 3 tiles).
    check(300, k2f, k2l, "cb", max_tile=128)

    print("KERNEL_OK")
</pallas_src>

<mosaic_0001>
module attributes {stable_mosaic.version = 11 : i64} {
  func.func @center_loss_kernel(%arg0: i32, %arg1: memref<2x8xf32, #tpu.memory_space<vmem>>, %arg2: memref<1x8xi32, #tpu.memory_space<vmem>>, %arg3: memref<10x2xf32, #tpu.memory_space<vmem>>, %arg4: memref<10x2xf32, #tpu.memory_space<vmem>>, %arg5: memref<10x8xf32, #tpu.memory_space<vmem>>, %arg6: memref<1x1x128xf32, #tpu.memory_space<vmem>>) attributes {dimension_semantics = [#tpu.dimension_semantics<parallel>], iteration_bounds = array<i64: 1>, scalar_prefetch = 0 : i64, scratch_operands = 0 : i64, tpu.core_type = #tpu.core_type<tc>, window_params = [{transform_indices = @transform_0, window_bounds = array<i64: 2, 8>}, {transform_indices = @transform_1, window_bounds = array<i64: 1, 8>}, {pipeline_mode = #tpu.pipeline_mode<synchronous>, transform_indices = @transform_2, window_bounds = array<i64: 10, 2>}, {pipeline_mode = #tpu.pipeline_mode<synchronous>, transform_indices = @transform_3, window_bounds = array<i64: 10, 2>}, {transform_indices = @transform_4, window_bounds = array<i64: 10, 8>}, {transform_indices = @transform_5, window_bounds = array<i64: 1, 1, 128>}]} {
    %c0 = arith.constant 0 : index
    %c0_0 = arith.constant 0 : index
    %0 = vector.load %arg1[%c0, %c0_0] : memref<2x8xf32, #tpu.memory_space<vmem>>, vector<2x8xf32>
    %c0_1 = arith.constant 0 : index
    %c0_2 = arith.constant 0 : index
    %1 = vector.load %arg2[%c0_1, %c0_2] : memref<1x8xi32, #tpu.memory_space<vmem>>, vector<1x8xi32>
    %c0_3 = arith.constant 0 : index
    %c0_4 = arith.constant 0 : index
    %2 = vector.load %arg3[%c0_3, %c0_4] : memref<10x2xf32, #tpu.memory_space<vmem>>, vector<10x2xf32>
    %c0_5 = arith.constant 0 : index
    %c0_6 = arith.constant 0 : index
    %3 = vector.load %arg4[%c0_5, %c0_6] : memref<10x2xf32, #tpu.memory_space<vmem>>, vector<10x2xf32>
    %4 = tpu.iota {dimensions = array<i32: 0>} : vector<10x8xi32>
    %5 = vector.broadcast %1 : vector<1x8xi32> to vector<10x8xi32>
    %6 = arith.cmpi eq, %4, %5 : vector<10x8xi32>
    %7 = arith.extui %6 : vector<10x8xi1> to vector<10x8xi32>
    %8 = arith.sitofp %7 : vector<10x8xi32> to vector<10x8xf32>
    %9 = vector.extract_strided_slice %3 {offsets = [0, 0], sizes = [10, 1], strides = [1, 1]} : vector<10x2xf32> to vector<10x1xf32>
    %10 = vector.extract_strided_slice %0 {offsets = [0, 0], sizes = [1, 8], strides = [1, 1]} : vector<2x8xf32> to vector<1x8xf32>
    %11 = vector.broadcast %9 : vector<10x1xf32> to vector<10x8xf32>
    %12 = vector.broadcast %10 : vector<1x8xf32> to vector<10x8xf32>
    %13 = arith.mulf %11, %12 : vector<10x8xf32>
    %14 = vector.extract_strided_slice %3 {offsets = [0, 1], sizes = [10, 1], strides = [1, 1]} : vector<10x2xf32> to vector<10x1xf32>
    %15 = vector.extract_strided_slice %0 {offsets = [1, 0], sizes = [1, 8], strides = [1, 1]} : vector<2x8xf32> to vector<1x8xf32>
    %16 = vector.broadcast %14 : vector<10x1xf32> to vector<10x8xf32>
    %17 = vector.broadcast %15 : vector<1x8xf32> to vector<10x8xf32>
    %18 = arith.mulf %16, %17 : vector<10x8xf32>
    %19 = arith.addf %13, %18 : vector<10x8xf32>
    %c0_7 = arith.constant 0 : index
    %c0_8 = arith.constant 0 : index
    %20 = vector.load %arg5[%c0_7, %c0_8] : memref<10x8xf32, #tpu.memory_space<vmem>>, vector<10x8xf32>
    tpu.vector_store %arg5[%c0_7, %c0_8], %19 {strides = array<i32>} : memref<10x8xf32, #tpu.memory_space<vmem>>, vector<10x8xf32>,
    %21 = vector.extract_strided_slice %2 {offsets = [0, 0], sizes = [10, 1], strides = [1, 1]} : vector<10x2xf32> to vector<10x1xf32>
    %22 = vector.broadcast %21 : vector<10x1xf32> to vector<10x8xf32>
    %23 = arith.mulf %8, %22 : vector<10x8xf32>
    %cst = arith.constant dense<0.000000e+00> : vector<8xf32>
    %24 = vector.multi_reduction <add>, %23, %cst [0] : vector<10x8xf32> to vector<8xf32>
    %25 = vector.shape_cast %24 : vector<8xf32> to vector<1x8xf32>
    %26 = vector.extract_strided_slice %2 {offsets = [0, 1], sizes = [10, 1], strides = [1, 1]} : vector<10x2xf32> to vector<10x1xf32>
    %27 = vector.broadcast %26 : vector<10x1xf32> to vector<10x8xf32>
    %28 = arith.mulf %8, %27 : vector<10x8xf32>
    %cst_9 = arith.constant dense<0.000000e+00> : vector<8xf32>
    %29 = vector.multi_reduction <add>, %28, %cst_9 [0] : vector<10x8xf32> to vector<8xf32>
    %30 = vector.shape_cast %29 : vector<8xf32> to vector<1x8xf32>
    %31 = vector.extract_strided_slice %0 {offsets = [0, 0], sizes = [1, 8], strides = [1, 1]} : vector<2x8xf32> to vector<1x8xf32>
    %32 = arith.subf %31, %25 : vector<1x8xf32>
    %33 = vector.extract_strided_slice %0 {offsets = [1, 0], sizes = [1, 8], strides = [1, 1]} : vector<2x8xf32> to vector<1x8xf32>
    %34 = arith.subf %33, %30 : vector<1x8xf32>
    %35 = arith.mulf %32, %32 : vector<1x8xf32>
    %36 = arith.mulf %34, %34 : vector<1x8xf32>
    %37 = arith.addf %35, %36 : vector<1x8xf32>
    %cst_10 = arith.constant dense<0xFF800000> : vector<8xf32>
    %38 = vector.multi_reduction <maximumf>, %19, %cst_10 [0] : vector<10x8xf32> to vector<8xf32>
    %39 = vector.shape_cast %38 : vector<8xf32> to vector<1x8xf32>
    %40 = vector.broadcast %39 : vector<1x8xf32> to vector<10x8xf32>
    %41 = arith.subf %19, %40 : vector<10x8xf32>
    %42 = math.exp %41 : vector<10x8xf32>
    %cst_11 = arith.constant dense<0.000000e+00> : vector<8xf32>
    %43 = vector.multi_reduction <add>, %42, %cst_11 [0] : vector<10x8xf32> to vector<8xf32>
    %44 = vector.shape_cast %43 : vector<8xf32> to vector<1x8xf32>
    %45 = math.log %44 : vector<1x8xf32>
    %46 = arith.addf %39, %45 : vector<1x8xf32>
    %47 = arith.mulf %8, %19 : vector<10x8xf32>
    %cst_12 = arith.constant dense<0.000000e+00> : vector<8xf32>
    %48 = vector.multi_reduction <add>, %47, %cst_12 [0] : vector<10x8xf32> to vector<8xf32>
    %49 = vector.shape_cast %48 : vector<8xf32> to vector<1x8xf32>
    %50 = arith.subf %46, %49 : vector<1x8xf32>
    %51 = tpu.iota {dimensions = array<i32: 2>} : vector<1x1x128xi32>
    %52 = vector.shape_cast %50 : vector<1x8xf32> to vector<1x1x8xf32>
    %cst_13 = arith.constant dense<0.000000e+00> : vector<1xf32>
    %53 = vector.multi_reduction <add>, %52, %cst_13 [1, 2] : vector<1x1x8xf32> to vector<1xf32>
    %54 = vector.shape_cast %53 : vector<1xf32> to vector<1x1x1xf32>
    %55 = vector.extract %54[0, 0, 0] : f32 from vector<1x1x1xf32>
    %56 = vector.shape_cast %37 : vector<1x8xf32> to vector<1x1x8xf32>
    %cst_14 = arith.constant dense<0.000000e+00> : vector<1xf32>
    %57 = vector.multi_reduction <add>, %56, %cst_14 [1, 2] : vector<1x1x8xf32> to vector<1xf32>
    %58 = vector.shape_cast %57 : vector<1xf32> to vector<1x1x1xf32>
    %59 = vector.extract %58[0, 0, 0] : f32 from vector<1x1x1xf32>
    %c0_i32 = arith.constant 0 : i32
    %60 = vector.broadcast %c0_i32 : i32 to vector<1x1x128xi32>
    %61 = arith.cmpi eq, %51, %60 : vector<1x1x128xi32>
    %c1_i32 = arith.constant 1 : i32
    %62 = vector.broadcast %c1_i32 : i32 to vector<1x1x128xi32>
    %63 = arith.cmpi eq, %51, %62 : vector<1x1x128xi32>
    %cst_15 = arith.constant 0.000000e+00 : f32
    %64 = vector.broadcast %59 : f32 to vector<1x1x128xf32>
    %65 = vector.broadcast %cst_15 : f32 to vector<1x1x128xf32>
    %66 = arith.select %63, %64, %65 : vector<1x1x128xi1>, vector<1x1x128xf32>
    %67 = vector.broadcast %55 : f32 to vector<1x1x128xf32>
    %68 = arith.select %61, %67, %66 : vector<1x1x128xi1>, vector<1x1x128xf32>
    %c0_16 = arith.constant 0 : index
    %c0_17 = arith.constant 0 : index
    %c0_18 = arith.constant 0 : index
    %69 = vector.load %arg6[%c0_16, %c0_17, %c0_18] : memref<1x1x128xf32, #tpu.memory_space<vmem>>, vector<1x1x128xf32>
    tpu.vector_store %arg6[%c0_16, %c0_17, %c0_18], %68 {strides = array<i32>} : memref<1x1x128xf32, #tpu.memory_space<vmem>>, vector<1x1x128xf32>,
    return
  }
  func.func @transform_0(%arg0: i32) -> (i32, i32) {
    %c0_i32 = arith.constant 0 : i32
    %c0_i32_0 = arith.constant 0 : i32
    return %c0_i32, %arg0 : i32, i32
  }
  func.func @transform_1(%arg0: i32) -> (i32, i32) {
    %c0_i32 = arith.constant 0 : i32
    %c0_i32_0 = arith.constant 0 : i32
    return %c0_i32, %arg0 : i32, i32
  }
  func.func @transform_2(%arg0: i32) -> (i32, i32) {
    %c0_i32 = arith.constant 0 : i32
    %c0_i32_0 = arith.constant 0 : i32
    %c0_i32_1 = arith.constant 0 : i32
    return %c0_i32, %c0_i32_0 : i32, i32
  }
  func.func @transform_3(%arg0: i32) -> (i32, i32) {
    %c0_i32 = arith.constant 0 : i32
    %c0_i32_0 = arith.constant 0 : i32
    %c0_i32_1 = arith.constant 0 : i32
    return %c0_i32, %c0_i32_0 : i32, i32
  }
  func.func @transform_4(%arg0: i32) -> (i32, i32) {
    %c0_i32 = arith.constant 0 : i32
    %c0_i32_0 = arith.constant 0 : i32
    return %c0_i32, %arg0 : i32, i32
  }
  func.func @transform_5(%arg0: i32) -> (i32, i32, i32) {
    %c0_i32 = arith.constant 0 : i32
    %c0_i32_0 = arith.constant 0 : i32
    %c0_i32_1 = arith.constant 0 : i32
    return %arg0, %c0_i32, %c0_i32_0 : i32, i32, i32
  }
}

</mosaic_0001>

<llo_original>
// kernel: tpu_custom_call.1
$region0: #{tpu_custom_call.1}
  #allocation0 [shape = 'u32[]', space=smem, size = 0x4, offset = 0x4, fixed_abs, tag = 'smem constant byte address 0x4 - core index']
  #allocation1 [shape = 'u32[144,128]{1,0:T(1,128)}', space=vmem, size = 0x12000, scoped, tag = 'internal scratch']
  %s0 = inlined_call_operand.vmem [shape: f32[2,8], index: 0, kind: input, shape index: {}]
  %s1 = inlined_call_operand.vmem [shape: s32[1,8], index: 1, kind: input, shape index: {}]
  %s2 = inlined_call_operand.vmem [shape: f32[10,2], index: 2, kind: input, shape index: {}]
  %s3 = inlined_call_operand.vmem [shape: f32[10,2], index: 3, kind: input, shape index: {}]
  %s4 = inlined_call_operand.vmem [shape: f32[10,8], index: 4, kind: output, shape index: {0}]
  %s5 = inlined_call_operand.hbm [shape: f32[1,1,128], index: 5, kind: output, shape index: {1}]
  %6 = xla_tuple %s4, %s5
  %s7 = sld [smem:[#allocation0]]
  $region34: #{tpu_custom_call.1} parent=0
    _
  %s9 = ssub.s32 1, %s7
  %s10 = scalar_select 0, %s9, %s7
  $region1: #{tpu_custom_call.1} parent=0
    #allocation2 [shape = 'u8[512]{0}', space=vmem, size = 0x400, scoped, tag = 'output window, operand 1, single buffered']
    #allocation3 [shape = 's32[1]{0}', space=sflag, size = 0x4, scoped, tag = 'scoped memory for tpu_custom_call.1']
    %11 = vsyncpa [#allocation3], 0
    // Predicated region
    $region2: #{tpu_custom_call.1} parent=1 // pred_check
      _
    $region3: #{tpu_custom_call.1} parent=1 // pred_check_branch
      %13 = sbr.rel (0) target = $region5
    $region4: #{tpu_custom_call.1} parent=1 // pred_region
      _
    $region5: #{tpu_custom_call.1} parent=1 // pred_fallthru
      _
    // Predicated region
    $region6: #{tpu_custom_call.1} parent=1 // pred_check
      _
    $region7: #{tpu_custom_call.1} parent=1 // pred_check_branch
      %15 = sbr.rel (0) target = $region9
    $region8: #{tpu_custom_call.1} parent=1 // pred_region
      _
    $region9: #{tpu_custom_call.1} parent=1 // pred_fallthru
      _
    // Predicated region
    $region10: #{tpu_custom_call.1} parent=1 // pred_check
      _
    $region11: #{tpu_custom_call.1} parent=1 // pred_check_branch
      %17 = sbr.rel (0) target = $region13
    $region12: #{tpu_custom_call.1} parent=1 // pred_region
      _
    $region13: #{tpu_custom_call.1} parent=1 // pred_fallthru
      _
    // Predicated region
    $region14: #{tpu_custom_call.1} parent=1 // pred_check
      _
    $region15: #{tpu_custom_call.1} parent=1 // pred_check_branch
      %19 = sbr.rel (0) target = $region17
    $region16: #{tpu_custom_call.1} parent=1 // pred_region
      _
    $region17: #{tpu_custom_call.1} parent=1 // pred_fallthru
      _
    %v20 = vld [vmem:[%s0] sm:$0x3]
    %v21 = vld [vmem:[%s1] sm:$0x1]
    %v22 = vld [vmem:[%s2] sm:$0xff]
    %v23 = vld [vmem:[%s2 + $0x8] sm:$0x3]
    %v24 = vld [vmem:[%s3] sm:$0xff]
    %v25 = vld [vmem:[%s3 + $0x8] sm:$0x3]
    %v26 = vlaneseq
    %v27 = vshrl.u32 %v26, 7
    %v28 = vadd.s32 %v27, 8
    %v29 = vlaneseq
    %v30 = vshrl.u32 %v29, 7
    %v31 = vsub.s32 0, %v30
    %v32 = vrot.slane %v21, %v31
    %vm33 = vcmp.eq.s32.totalorder %v27, %v32
    %vm34 = vcmp.eq.s32.totalorder %v28, %v32
    %v35 = vsel %vm33, 1, 0
    %v36 = vsel %vm34, 1, 0
    %v37 = vcvt.s32.f32 %v35
    %v38 = vcvt.s32.f32 %v36
    %40 = vset.pattern.permute.xlu0 0
    %41 = vperm.xlu0 %40, %v24
    %v42 = vpop.permute.xlu0 %41
    %45 = vset.pattern.permute.xlu0 0
    %46 = vperm.xlu0 %45, %v25
    %v47 = vpop.permute.xlu0 %46
    %v49 = vlaneseq
    %v50 = vshrl.u32 %v49, 7
    %v51 = vsub.s32 0, %v50
    %v52 = vrot.slane %v20, %v51
    %v53 = vmul.f32 %v42, %v52
    %v54 = vmul.f32 %v47, %v52
    %55 = vset.pattern.permute.xlu0 1
    %56 = vperm.xlu0 %55, %v24
    %v57 = vpop.permute.xlu0 %56
    %59 = vset.pattern.permute.xlu0 1
    %60 = vperm.xlu0 %59, %v25
    %v61 = vpop.permute.xlu0 %60
    %v63 = vlaneseq
    %v64 = vshrl.u32 %v63, 7
    %v65 = vsub.s32 1, %v64
    %v66 = vrot.slane %v20, %v65
    %v67 = vmul.f32 %v57, %v66
    %v68 = vmul.f32 %v61, %v66
    %v69 = vadd.f32 %v53, %v67
    %v70 = vadd.f32 %v54, %v68
    %vm71 = vcmask 64512
    %72 = vst.msk [vmem:[%s4] sm:$0xff] %vm71, %v69
    %vm73 = vcmask 58368
    %74 = vst.msk [vmem:[%s4 + $0x8] sm:$0x3] %vm73, %v70
    %76 = vset.pattern.permute.xlu0 0
    %77 = vperm.xlu0 %76, %v22
    %v78 = vpop.permute.xlu0 %77
    %81 = vset.pattern.permute.xlu0 0
    %82 = vperm.xlu0 %81, %v23
    %v83 = vpop.permute.xlu0 %82
    %v85 = vmul.f32 %v37, %v78
    %v86 = vmul.f32 %v38, %v83
    %v87 = vsel %vm71, %v85, 0.0
    %v88 = vsel %vm73, %v86, 0.0
    %v89 = vadd.f32 %v87, %v88
    %v90 = vrot.slane %v89, 4
    %v91 = vadd.f32 %v89, %v90
    %v92 = vrot.slane %v91, 2
    %v93 = vadd.f32 %v91, %v92
    %v94 = vrot.slane %v93, 1
    %v95 = vadd.f32 %v93, %v94
    %96 = vset.pattern.permute.xlu0 1
    %97 = vperm.xlu0 %96, %v22
    %v98 = vpop.permute.xlu0 %97
    %100 = vset.pattern.permute.xlu0 1
    %101 = vperm.xlu0 %100, %v23
    %v102 = vpop.permute.xlu0 %101
    %v104 = vmul.f32 %v37, %v98
    %v105 = vmul.f32 %v38, %v102
    %v106 = vsel %vm71, %v104, 0.0
    %v107 = vsel %vm73, %v105, 0.0
    %v108 = vadd.f32 %v106, %v107
    %v109 = vrot.slane %v108, 4
    %v110 = vadd.f32 %v108, %v109
    %v111 = vrot.slane %v110, 2
    %v112 = vadd.f32 %v110, %v111
    %v113 = vrot.slane %v112, 1
    %v114 = vadd.f32 %v112, %v113
    %v115 = vsub.f32 %v20, %v95
    %v116 = vsub.f32 %v20, %v114
    %v117 = vmul.f32 %v115, %v115
    %v118 = vmul.f32 %v116, %v116
    %v120 = vrot.slane %v118, 1
    %v122 = vadd.f32 %v117, %v120
    %v123 = vsel %vm71, %v69, -inf
    %v124 = vsel %vm73, %v70, -inf
    %v125 = vmax.f32 %v123, %v124
    %v126 = vrot.slane %v125, 4
    %v127 = vmax.f32 %v125, %v126
    %v128 = vrot.slane %v127, 2
    %v129 = vmax.f32 %v127, %v128
    %v130 = vrot.slane %v129, 1
    %v131 = vmax.f32 %v129, %v130
    %v132 = vsub.f32 %v69, %v131
    %v133 = vsub.f32 %v70, %v131
    %v134 = vmul.f32 %v132, 1.442695
    %v135 = vpow.pop %v134
    %v136 = vmul.f32 %v133, 1.442695
    %v137 = vpow.pop %v136
    %v138 = vsel %vm71, %v135, 0.0
    %v139 = vsel %vm73, %v137, 0.0
    %v140 = vadd.f32 %v138, %v139
    %v141 = vrot.slane %v140, 4
    %v142 = vadd.f32 %v140, %v141
    %v143 = vrot.slane %v142, 2
    %v144 = vadd.f32 %v142, %v143
    %v145 = vrot.slane %v144, 1
    %v146 = vadd.f32 %v144, %v145
    %v147 = vlog2.pop %v146
    %v148 = vmul.f32 %v147, 0.6931472
    %v149 = vadd.f32 %v131, %v148
    %v150 = vmul.f32 %v37, %v69
    %v151 = vmul.f32 %v38, %v70
    %v152 = vsel %vm71, %v150, 0.0
    %v153 = vsel %vm73, %v151, 0.0
    %v154 = vadd.f32 %v152, %v153
    %v155 = vrot.slane %v154, 4
    %v156 = vadd.f32 %v154, %v155
    %v157 = vrot.slane %v156, 2
    %v158 = vadd.f32 %v156, %v157
    %v159 = vrot.slane %v158, 1
    %v160 = vadd.f32 %v158, %v159
    %v161 = vsub.f32 %v149, %v160
    %v162 = vlaneseq
    %v163 = vand.u32 %v162, 127
    %vm164 = vcmask 57344
    %v165 = vsel %vm164, %v161, 0.0
    %166 = vadd.xlane.f32.xlu0 %v165
    %v167 = vpop.xlane.xlu0 %166
    %v168 = vrot.slane %v167, 4
    %v169 = vadd.f32 %v167, %v168
    %v170 = vrot.slane %v169, 2
    %v171 = vadd.f32 %v169, %v170
    %v172 = vrot.slane %v171, 1
    %v173 = vadd.f32 %v171, %v172
    %s174 = vtos %v173
    %v175 = vsel %vm164, %v122, 0.0
    %176 = vadd.xlane.f32.xlu0 %v175
    %v177 = vpop.xlane.xlu0 %176
    %v178 = vrot.slane %v177, 4
    %v179 = vadd.f32 %v177, %v178
    %v180 = vrot.slane %v179, 2
    %v181 = vadd.f32 %v179, %v180
    %v182 = vrot.slane %v181, 1
    %v183 = vadd.f32 %v181, %v182
    %s184 = vtos %v183
    %vm185 = vcmp.eq.s32.totalorder %v163, 0
    %vm186 = vcmp.eq.s32.totalorder %v163, 1
    %v187 = vstv %s184
    %v188 = vsel %vm186, %v187, 0.0
    %v189 = vstv %s174
    %v190 = vsel %vm185, %v189, %v188
    %191 = vst [vmem:[#allocation2] sm:$0x1] %v190
    // Predicated region
    $region18: #{tpu_custom_call.1} parent=1 // pred_check
      _
    $region19: #{tpu_custom_call.1} parent=1 // pred_check_branch
      %193 = sbr.rel (0) target = $region21
    $region20: #{tpu_custom_call.1} parent=1 // pred_region
      _
    $region21: #{tpu_custom_call.1} parent=1 // pred_fallthru
      _
    // Predicated region
    $region22: #{tpu_custom_call.1} parent=1 // pred_check
      _
    $region23: #{tpu_custom_call.1} parent=1 // pred_check_branch
      %195 = sbr.rel (0) target = $region25
    $region24: #{tpu_custom_call.1} parent=1 // pred_region
      %s197 = ssub.s32 16, 16
      %198 = vsyncadd [#allocation3], %s197
      %s200 = sshll.u32 [#allocation2], 4
      %s201 = int_to_ptr.vmem [resolvable:$true] %s200
      %203 = dma.vmem_to_hbm [thread:$0]  %s201, 16, %s5, [#allocation3]
    $region25: #{tpu_custom_call.1} parent=1 // pred_fallthru
      _
    // Predicated region
    $region26: #{tpu_custom_call.1} parent=1 // pred_check
      _
    $region27: #{tpu_custom_call.1} parent=1 // pred_check_branch
      %205 = sbr.rel (0) target = $region29
    $region28: #{tpu_custom_call.1} parent=1 // pred_region
      _
    $region29: #{tpu_custom_call.1} parent=1 // pred_fallthru
      _
    // Predicated region
    $region30: #{tpu_custom_call.1} parent=1 // pred_check
      _
    $region31: #{tpu_custom_call.1} parent=1 // pred_check_branch
      %207 = sbr.rel (0) target = $region33
    $region32: #{tpu_custom_call.1} parent=1 // pred_region
      %208 = dma.done [#allocation3], 16
    $region33: #{tpu_custom_call.1} parent=1 // pred_fallthru
      _
    %209 = vsyncpa [#allocation3], 1

</llo_original>
